<compile_context>
chip_gen: v7x
topology: tpu7x:2x2x1
jax: 0.10.0
libtpu: 0.0.40
codegen_flags: <defaults>
</compile_context>

<pallas_src>
import functools

import jax
import jax.numpy as jnp
from jax import lax
from jax.experimental import pallas as pl
from jax.experimental.pallas import tpu as pltpu

MIN_DEPTH = 0.1
MAX_DEPTH = 100.0


def _round_up(x, m):
    return (x + m - 1) // m * m


# ------------------ Kernel 1: tiled matmul + bias + ReLU (bf16 MXU, f32 acc) ------------------

def _mm_bias_act_kernel(x_ref, w_ref, b_ref, o_ref, acc_ref, *, act):
    k = pl.program_id(2)

    @pl.when(k == 0)
    def _init():
        # Fold the bias into the accumulator init: no per-K-step add, no finalize add.
        acc_ref[...] = jnp.broadcast_to(b_ref[...], acc_ref.shape)

    acc_ref[...] += jnp.dot(x_ref[...], w_ref[...],
                            preferred_element_type=jnp.float32)

    @pl.when(k == pl.num_programs(2) - 1)
    def _finalize():
        acc = acc_ref[...]                      # epilogue in f32 (v5e has no bf16 VPU)
        if act == "relu":
            acc = jnp.maximum(acc, 0.0)
        o_ref[...] = acc.astype(o_ref.dtype)


def matmul_bias_act(x, w, b, *, act="relu", out_dtype=jnp.bfloat16):
    """act(x @ w + b).  x:[M,K], w:[K,N], b:[N].

    Operands are cast to bf16 for the MXU; accumulation + activation stay f32.
    N is padded to a multiple of 128 so the output tile is lane-dense; M/K are padded to
    multiples of 16 (accepted & documented padding for small channel counts)."""
    M, K = x.shape
    K2, N = w.shape
    assert K == K2 and b.shape == (N,)

    # Tile selection.  Tiles are <= 128x512 bf16 (a few hundred KiB incl. double-buffering),
    # comfortably inside v7x's 64 MiB physical / 32 MiB scoped VMEM as well as v5e/v6e.
    Mp = _round_up(M, 16)
    tm = min(128, Mp)
    Mp = _round_up(Mp, tm)
    Np = _round_up(N, 128)
    tn = 128
    if K <= 512:
        Kp = _round_up(K, 16)
        tk = Kp                                   # single K step; full-K block is legal
    else:
        tk = 512
        Kp = _round_up(K, tk)

    xp = jnp.pad(x.astype(jnp.bfloat16), ((0, Mp - M), (0, Kp - K)))
    wp = jnp.pad(w.astype(jnp.bfloat16), ((0, Kp - K), (0, Np - N)))
    bp = jnp.pad(b.astype(jnp.float32), (0, Np - N)).reshape(1, Np)

    grid = (Mp // tm, Np // tn, Kp // tk)
    out = pl.pallas_call(
        functools.partial(_mm_bias_act_kernel, act=act),
        out_shape=jax.ShapeDtypeStruct((Mp, Np), out_dtype),
        grid=grid,
        in_specs=[
            pl.BlockSpec((tm, tk), lambda i, j, k: (i, k)),
            pl.BlockSpec((tk, tn), lambda i, j, k: (k, j)),
            pl.BlockSpec((1, tn), lambda i, j, k: (0, j)),
        ],
        out_specs=pl.BlockSpec((tm, tn), lambda i, j, k: (i, j)),
        scratch_shapes=[pltpu.VMEM((tm, tn), jnp.float32)],
        compiler_params=pltpu.CompilerParams(
            # M/N parallel -> shards across v7x's 2 TensorCores; K is the reduction axis.
            dimension_semantics=("parallel", "parallel", "arbitrary"),
            vmem_limit_bytes=32 * 1024 * 1024,
        ),
    )(xp, wp, bp)
    return out[:M, :N]


# ------------------------- Encoder conv = im2col (glue) + tiled MXU matmul -------------------------

def conv2d_relu_mxu(x_nhwc, w_oihw, b, *, stride, padding):
    """KxK conv + bias + ReLU.  Patch matrix is built in glue in bf16 (half the HBM traffic of
    f32); the matmul/bias/ReLU run in the tiled Pallas kernel above.
    NOTE: at production resolutions the KH*KW taps should be folded into the kernel as a
    reduction axis / manual DMA to avoid the 9x HBM patch blow-up; at these toy feature sizes
    the glue im2col traffic is negligible."""
    N, H, W, Cin = x_nhwc.shape
    Cout, Cin2, KH, KW = w_oihw.shape
    assert Cin == Cin2
    xp = jnp.pad(x_nhwc.astype(jnp.bfloat16),
                 ((0, 0), (padding, padding), (padding, padding), (0, 0)))
    Ho = (H + 2 * padding - KH) // stride + 1
    Wo = (W + 2 * padding - KW) // stride + 1

    patches = []
    for dh in range(KH):
        for dw in range(KW):
            patches.append(xp[:, dh:dh + stride * Ho:stride, dw:dw + stride * Wo:stride, :])
    pat2d = jnp.concatenate(patches, axis=-1).reshape(N * Ho * Wo, KH * KW * Cin)

    # OIHW -> (KH, KW, Cin, Cout) to match patch channel ordering, then flatten.
    w2d = jnp.transpose(w_oihw, (2, 3, 1, 0)).reshape(KH * KW * Cin, Cout)
    out2d = matmul_bias_act(pat2d, w2d, b, act="relu", out_dtype=jnp.bfloat16)
    return out2d.reshape(N, Ho, Wo, Cout)


# ---------------- Kernel 2: fused Cout=1 disparity head + disp_to_depth (VPU/EUP) ----------------

def _disp_head_depth_kernel(x_ref, w_ref, b_ref, o_ref, *, C, H, W, min_depth, max_depth):
    """3x3 stride-1 Cout=1 conv as a VPU tap reduction (W on the lane axis, lane-dense output),
    with sigmoid -> scaled_disp -> approx reciprocal fused so the disparity map never touches HBM."""
    acc = jnp.zeros((H, W), jnp.float32)
    for c in range(C):
        plane = x_ref[c].astype(jnp.float32)               # (H+2, W+2), f32 math
        for dh in range(3):
            for dw in range(3):
                wt = w_ref[(dh * 3 + dw) * C + c]          # scalar weight from SMEM
                acc = acc + wt * plane[dh:dh + H, dw:dw + W]
    z = acc + b_ref[0]
    sig = 1.0 / (1.0 + jnp.exp(-z))                        # sigmoid (EUP exp)
    min_disp = 1.0 / max_depth
    max_disp = 1.0 / min_depth
    scaled_disp = min_disp + (max_disp - min_disp) * sig
    depth = pl.reciprocal(scaled_disp, approx=True)        # EUP vrcp slot, near-free
    o_ref[...] = depth.astype(o_ref.dtype)


def disp_head_to_depth(feat_nhwc, w_oihw, b, *, min_depth=MIN_DEPTH, max_depth=MAX_DEPTH):
    """Fused disparity head + disp_to_depth.  Returns depth of shape [N, H, W] (lane axis = W)."""
    N, H, W, C = feat_nhwc.shape
    assert w_oihw.shape == (1, C, 3, 3) and b.shape == (1,)
    x_chw = jnp.transpose(feat_nhwc, (0, 3, 1, 2))                    # [N, C, H, W]
    x_pad = jnp.pad(x_chw, ((0, 0), (0, 0), (1, 1), (1, 1)))          # [N, C, H+2, W+2]
    # Taps flattened (dh, dw, c) to match the kernel index math; scalars live in SMEM.
    w_flat = jnp.transpose(w_oihw[0], (1, 2, 0)).reshape(-1).astype(jnp.float32)
    b_flat = b.astype(jnp.float32)

    return pl.pallas_call(
        functools.partial(_disp_head_depth_kernel, C=C, H=H, W=W,
                          min_depth=min_depth, max_depth=max_depth),
        out_shape=jax.ShapeDtypeStruct((N, H, W), jnp.float32),
        grid=(N,),
        in_specs=[
            pl.BlockSpec((None, C, H + 2, W + 2), lambda n: (n, 0, 0, 0)),
            pl.BlockSpec(memory_space=pltpu.MemorySpace.SMEM),
            pl.BlockSpec(memory_space=pltpu.MemorySpace.SMEM),
        ],
        out_specs=pl.BlockSpec((None, H, W), lambda n: (n, 0, 0)),
        compiler_params=pltpu.CompilerParams(
            dimension_semantics=("parallel",),      # batch shards across v7x's 2 TCs
            vmem_limit_bytes=32 * 1024 * 1024,
        ),
    )(x_pad, w_flat, b_flat)


# --------------------------- Synthetic encoder / decoder params ---------------------------

def init_params(key, in_ch=3, c1=8, c2=16):
    ks = jax.random.split(key, 8)
    return {
        # encoder
        "enc1_w": 0.1 * jax.random.normal(ks[0], (c1, in_ch, 3, 3), jnp.float32),
        "enc1_b": 0.01 * jax.random.normal(ks[1], (c1,), jnp.float32),
        "enc2_w": 0.1 * jax.random.normal(ks[2], (c2, c1, 3, 3), jnp.float32),
        "enc2_b": 0.01 * jax.random.normal(ks[3], (c2,), jnp.float32),
        # decoder disparity heads (one per scale), sigmoid output
        "disp1_w": 0.1 * jax.random.normal(ks[4], (1, c2, 3, 3), jnp.float32),
        "disp1_b": 0.01 * jax.random.normal(ks[5], (1,), jnp.float32),
        "disp0_w": 0.1 * jax.random.normal(ks[6], (1, c1, 3, 3), jnp.float32),
        "disp0_b": 0.01 * jax.random.normal(ks[7], (1,), jnp.float32),
    }


def depth_encoder(params, x_nhwc):
    f1 = conv2d_relu_mxu(x_nhwc, params["enc1_w"], params["enc1_b"], stride=2, padding=1)
    f2 = conv2d_relu_mxu(f1, params["enc2_w"], params["enc2_b"], stride=2, padding=1)
    return [f1, f2]                                  # [N,H/2,W/2,c1], [N,H/4,W/4,c2]


def depth_decoder_to_depth(params, features):
    """Decoder disparity heads with disp_to_depth fused into the Pallas epilogue.
    Dict insertion order mirrors the reference decoder: coarse scale first, fine scale last."""
    depth_dict = {}
    depth_dict[("disp", 1)] = disp_head_to_depth(features[1], params["disp1_w"], params["disp1_b"])
    depth_dict[("disp", 0)] = disp_head_to_depth(features[0], params["disp0_w"], params["disp0_b"])
    return depth_dict


def br_depth_net_forward(params, images_nchw):
    """Mirrors BrDepthNet.forward: encoder -> decoder -> disp_to_depth -> reversed list.
    (disp_to_depth is fused into each disparity head's Pallas epilogue.)"""
    x_nhwc = jnp.transpose(images_nchw, (0, 2, 3, 1))
    features = depth_encoder(params, x_nhwc)
    depth_dict = depth_decoder_to_depth(params, features)
    depth_list = [depth_dict[key] for key in depth_dict]
    # back to PyTorch NCHW convention: [N, H, W] -> [N, 1, H, W]
    depth_list = [d[:, None, :, :] for d in depth_list]
    return depth_list[::-1]


# ----------------------------------- pure-JAX f32 reference -----------------------------------

def _reference_forward(params, images_nchw, min_depth=MIN_DEPTH, max_depth=MAX_DEPTH):
    x = jnp.transpose(images_nchw, (0, 2, 3, 1))

    def conv(x, w, b, stride):
        y = lax.conv_general_dilated(x, w, (stride, stride), [(1, 1), (1, 1)],
                                     dimension_numbers=("NHWC", "OIHW", "NHWC"))
        return y + b

    f1 = jax.nn.relu(conv(x, params["enc1_w"], params["enc1_b"], 2))
    f2 = jax.nn.relu(conv(f1, params["enc2_w"], params["enc2_b"], 2))

    def head(f, w, b):
        disp = jax.nn.sigmoid(conv(f, w, b, 1))
        scaled = 1.0 / max_depth + (1.0 / min_depth - 1.0 / max_depth) * disp
        return 1.0 / scaled                               # [N, H, W, 1]

    d1 = head(f2, params["disp1_w"], params["disp1_b"])
    d0 = head(f1, params["disp0_w"], params["disp0_b"])
    return [jnp.transpose(d0, (0, 3, 1, 2)), jnp.transpose(d1, (0, 3, 1, 2))]


# ----------------------------------- main -----------------------------------

if __name__ == "__main__":
    key = jax.random.PRNGKey(0)
    pkey, xkey = jax.random.split(key)
    params = init_params(pkey, in_ch=3, c1=8, c2=16)

    images = jax.random.normal(xkey, (2, 3, 16, 16), jnp.float32)   # NCHW, like PyTorch

    depth_list = br_depth_net_forward(params, images)
    depth_list = [jax.block_until_ready(d) for d in depth_list]

    # Shape / range sanity (fine scale first because the list is reversed).
    assert depth_list[0].shape == (2, 1, 8, 8)
    assert depth_list[1].shape == (2, 1, 4, 4)
    for d in depth_list:
        assert bool(jnp.all(d > 0.0)) and bool(jnp.all(d <= MAX_DEPTH * 1.02))

    # Tolerance check vs pure-JAX f32 reference (bf16 MXU + approx reciprocal deltas expected).
    ref_list = _reference_forward(params, images)
    for got, ref in zip(depth_list, ref_list):
        assert bool(jnp.allclose(got, ref, rtol=5e-2, atol=1e-2)), float(jnp.max(jnp.abs(got - ref)))

    print("KERNEL_OK")
</pallas_src>

<mosaic_0001>
module attributes {stable_mosaic.version = 11 : i64} {
  func.func @_mm_bias_act_kernel(%arg0: i32, %arg1: i32, %arg2: i32, %arg3: memref<128x32xbf16, #tpu.memory_space<vmem>>, %arg4: memref<32x128xbf16, #tpu.memory_space<vmem>>, %arg5: memref<1x128xf32, #tpu.memory_space<vmem>>, %arg6: memref<128x128xbf16, #tpu.memory_space<vmem>>, %arg7: memref<128x128xf32, #tpu.memory_space<vmem>>) attributes {dimension_semantics = [#tpu.dimension_semantics<parallel>, #tpu.dimension_semantics<parallel>, #tpu.dimension_semantics<arbitrary>], iteration_bounds = array<i64: 1, 1, 1>, scalar_prefetch = 0 : i64, scratch_operands = 1 : i64, tpu.core_type = #tpu.core_type<tc>, window_params = [{transform_indices = @transform_0, window_bounds = array<i64: 128, 32>}, {transform_indices = @transform_1, window_bounds = array<i64: 32, 128>}, {transform_indices = @transform_2, window_bounds = array<i64: 1, 128>}, {transform_indices = @transform_3, window_bounds = array<i64: 128, 128>}]} {
    %c0_i32 = arith.constant 0 : i32
    %0 = arith.cmpi eq, %arg2, %c0_i32 : i32
    %1 = arith.extui %0 : i1 to i32
    %c0_i32_0 = arith.constant 0 : i32
    %2 = arith.cmpi ne, %1, %c0_i32_0 : i32
    scf.if %2 {
      %c0_10 = arith.constant 0 : index
      %c0_11 = arith.constant 0 : index
      %12 = vector.load %arg5[%c0_10, %c0_11] : memref<1x128xf32, #tpu.memory_space<vmem>>, vector<1x128xf32>
      %13 = vector.shape_cast %12 : vector<1x128xf32> to vector<1x128xf32>
      %14 = vector.broadcast %13 : vector<1x128xf32> to vector<128x128xf32>
      %c0_12 = arith.constant 0 : index
      %c0_13 = arith.constant 0 : index
      %15 = vector.load %arg7[%c0_12, %c0_13] : memref<128x128xf32, #tpu.memory_space<vmem>>, vector<128x128xf32>
      tpu.vector_store %arg7[%c0_12, %c0_13], %14 {strides = array<i32>} : memref<128x128xf32, #tpu.memory_space<vmem>>, vector<128x128xf32>,
    } else {
    }
    %c0 = arith.constant 0 : index
    %c0_1 = arith.constant 0 : index
    %3 = vector.load %arg7[%c0, %c0_1] : memref<128x128xf32, #tpu.memory_space<vmem>>, vector<128x128xf32>
    %c0_2 = arith.constant 0 : index
    %c0_3 = arith.constant 0 : index
    %4 = vector.load %arg3[%c0_2, %c0_3] : memref<128x32xbf16, #tpu.memory_space<vmem>>, vector<128x32xbf16>
    %c0_4 = arith.constant 0 : index
    %c0_5 = arith.constant 0 : index
    %5 = vector.load %arg4[%c0_4, %c0_5] : memref<32x128xbf16, #tpu.memory_space<vmem>>, vector<32x128xbf16>
    %cst = arith.constant dense<0.000000e+00> : vector<128x128xf32>
    %6 = tpu.matmul %4, %5, %cst {dimension_numbers = #tpu.dot_dimension_numbers<[1], [0], [0], [1], [0, 0, 1, 1], [], []>} : vector<128x32xbf16>, vector<32x128xbf16>, vector<128x128xf32> -> vector<128x128xf32>
    %7 = arith.addf %3, %6 : vector<128x128xf32>
    %c0_6 = arith.constant 0 : index
    %c0_7 = arith.constant 0 : index
    %8 = vector.load %arg7[%c0_6, %c0_7] : memref<128x128xf32, #tpu.memory_space<vmem>>, vector<128x128xf32>
    tpu.vector_store %arg7[%c0_6, %c0_7], %7 {strides = array<i32>} : memref<128x128xf32, #tpu.memory_space<vmem>>, vector<128x128xf32>,
    %c0_i32_8 = arith.constant 0 : i32
    %9 = arith.cmpi eq, %arg2, %c0_i32_8 : i32
    %10 = arith.extui %9 : i1 to i32
    %c0_i32_9 = arith.constant 0 : i32
    %11 = arith.cmpi ne, %10, %c0_i32_9 : i32
    scf.if %11 {
      %c0_10 = arith.constant 0 : index
      %c0_11 = arith.constant 0 : index
      %12 = vector.load %arg7[%c0_10, %c0_11] : memref<128x128xf32, #tpu.memory_space<vmem>>, vector<128x128xf32>
      %cst_12 = arith.constant 0.000000e+00 : f32
      %13 = vector.broadcast %cst_12 : f32 to vector<128x128xf32>
      %14 = arith.maximumf %12, %13 : vector<128x128xf32>
      %15 = arith.truncf %14 : vector<128x128xf32> to vector<128x128xbf16>
      %c0_13 = arith.constant 0 : index
      %c0_14 = arith.constant 0 : index
      %16 = vector.load %arg6[%c0_13, %c0_14] : memref<128x128xbf16, #tpu.memory_space<vmem>>, vector<128x128xbf16>
      tpu.vector_store %arg6[%c0_13, %c0_14], %15 {strides = array<i32>} : memref<128x128xbf16, #tpu.memory_space<vmem>>, vector<128x128xbf16>,
    } else {
    }
    return
  }
  func.func @transform_0(%arg0: i32, %arg1: i32, %arg2: i32) -> (i32, i32) {
    %c0_i32 = arith.constant 0 : i32
    return %arg0, %arg2 : i32, i32
  }
  func.func @transform_1(%arg0: i32, %arg1: i32, %arg2: i32) -> (i32, i32) {
    %c0_i32 = arith.constant 0 : i32
    return %arg2, %arg1 : i32, i32
  }
  func.func @transform_2(%arg0: i32, %arg1: i32, %arg2: i32) -> (i32, i32) {
    %c0_i32 = arith.constant 0 : i32
    %c0_i32_0 = arith.constant 0 : i32
    return %c0_i32, %arg1 : i32, i32
  }
  func.func @transform_3(%arg0: i32, %arg1: i32, %arg2: i32) -> (i32, i32) {
    %c0_i32 = arith.constant 0 : i32
    return %arg0, %arg1 : i32, i32
  }
}

</mosaic_0001>

<llo_original>
// kernel: tpu_custom_call.1
$region0: #{tpu_custom_call.1}
  #allocation0 [shape = 'u32[]', space=smem, size = 0x4, offset = 0x4, fixed_abs, tag = 'smem constant byte address 0x4 - core index']
  #allocation1 [shape = 'u32[144,128]{1,0:T(1,128)}', space=vmem, size = 0x12000, scoped, tag = 'internal scratch']
  #allocation2 [shape = 'f32[128,128]{1,0:T(8,128)}', space=vmem, size = 0x10000, scoped, tag = 'scratch operand']
  %s0 = inlined_call_operand.vmem [shape: bf16[128,32], index: 0, kind: input, shape index: {}]
  %s1 = inlined_call_operand.vmem [shape: bf16[32,128], index: 1, kind: input, shape index: {}]
  %s2 = inlined_call_operand.vmem [shape: f32[1,128], index: 2, kind: input, shape index: {}]
  %s3 = inlined_call_operand.hbm [shape: bf16[128,128], index: 3, kind: output, shape index: {}]
  %s4 = sld [smem:[#allocation0]]
  $region30: #{tpu_custom_call.1} parent=0
    _
  %s6 = ssub.s32 1, %s4
  %s7 = scalar_select 0, %s6, %s4
  $region1: #{tpu_custom_call.1} parent=0
    #allocation3 [shape = 'u8[32768]{0}', space=vmem, size = 0x8000, scoped, tag = 'output window, operand 0, single buffered']
    #allocation4 [shape = 's32[1]{0}', space=sflag, size = 0x4, scoped, tag = 'scoped memory for tpu_custom_call.1']
    %8 = vsyncpa [#allocation4], 0
    // Predicated region
    $region2: #{tpu_custom_call.1} parent=1 // pred_check
      _
    $region3: #{tpu_custom_call.1} parent=1 // pred_check_branch
      %10 = sbr.rel (0) target = $region5
    $region4: #{tpu_custom_call.1} parent=1 // pred_region
      _
    $region5: #{tpu_custom_call.1} parent=1 // pred_fallthru
      _
    // Predicated region
    $region6: #{tpu_custom_call.1} parent=1 // pred_check
      _
    $region7: #{tpu_custom_call.1} parent=1 // pred_check_branch
      %12 = sbr.rel (0) target = $region9
    $region8: #{tpu_custom_call.1} parent=1 // pred_region
      _
    $region9: #{tpu_custom_call.1} parent=1 // pred_fallthru
      _
    // Predicated region
    $region10: #{tpu_custom_call.1} parent=1 // pred_check
      _
    $region11: #{tpu_custom_call.1} parent=1 // pred_check_branch
      %14 = sbr.rel (0) target = $region13
    $region12: #{tpu_custom_call.1} parent=1 // pred_region
      _
    $region13: #{tpu_custom_call.1} parent=1 // pred_fallthru
      _
    %p16 = scmp.eq.s32.totalorder 0, 0
    // Predicated region
    $region14: #{tpu_custom_call.1} parent=1 // pred_check
      %p17 = pneg %p16
    $region15: #{tpu_custom_call.1} parent=1 // pred_check_branch
      %19 = sbr.rel (%p17) target = $region17
    $region16: #{tpu_custom_call.1} parent=1 // pred_region
      %v20 = vld [vmem:[%s2] sm:$0x1]
      %v22 = vlaneseq
      %v23 = vshrl.u32 %v22, 7
      %v24 = vsub.s32 0, %v23
      %v25 = vrot.slane %v20, %v24
      %27 = vst [vmem:[#allocation2] sm:$0xff] %v25
      %28 = vst [vmem:[#allocation2 + $0x8] sm:$0xff] %v25
      %29 = vst [vmem:[#allocation2 + $0x10] sm:$0xff] %v25
      %30 = vst [vmem:[#allocation2 + $0x18] sm:$0xff] %v25
      %31 = vst [vmem:[#allocation2 + $0x20] sm:$0xff] %v25
      %32 = vst [vmem:[#allocation2 + $0x28] sm:$0xff] %v25
      %33 = vst [vmem:[#allocation2 + $0x30] sm:$0xff] %v25
      %34 = vst [vmem:[#allocation2 + $0x38] sm:$0xff] %v25
      %35 = vst [vmem:[#allocation2 + $0x40] sm:$0xff] %v25
      %36 = vst [vmem:[#allocation2 + $0x48] sm:$0xff] %v25
      %37 = vst [vmem:[#allocation2 + $0x50] sm:$0xff] %v25
      %38 = vst [vmem:[#allocation2 + $0x58] sm:$0xff] %v25
      %39 = vst [vmem:[#allocation2 + $0x60] sm:$0xff] %v25
      %40 = vst [vmem:[#allocation2 + $0x68] sm:$0xff] %v25
      %41 = vst [vmem:[#allocation2 + $0x70] sm:$0xff] %v25
      %42 = vst [vmem:[#allocation2 + $0x78] sm:$0xff] %v25
    $region17: #{tpu_custom_call.1} parent=1 // pred_fallthru
      _
    %v43 = vld [vmem:[#allocation2] sm:$0xff]
    %v44 = vld [vmem:[#allocation2 + $0x8] sm:$0xff]
    %v45 = vld [vmem:[#allocation2 + $0x10] sm:$0xff]
    %v46 = vld [vmem:[#allocation2 + $0x18] sm:$0xff]
    %v47 = vld [vmem:[#allocation2 + $0x20] sm:$0xff]
    %v48 = vld [vmem:[#allocation2 + $0x28] sm:$0xff]
    %v49 = vld [vmem:[#allocation2 + $0x30] sm:$0xff]
    %v50 = vld [vmem:[#allocation2 + $0x38] sm:$0xff]
    %v51 = vld [vmem:[#allocation2 + $0x40] sm:$0xff]
    %v52 = vld [vmem:[#allocation2 + $0x48] sm:$0xff]
    %v53 = vld [vmem:[#allocation2 + $0x50] sm:$0xff]
    %v54 = vld [vmem:[#allocation2 + $0x58] sm:$0xff]
    %v55 = vld [vmem:[#allocation2 + $0x60] sm:$0xff]
    %v56 = vld [vmem:[#allocation2 + $0x68] sm:$0xff]
    %v57 = vld [vmem:[#allocation2 + $0x70] sm:$0xff]
    %v58 = vld [vmem:[#allocation2 + $0x78] sm:$0xff]
    %v59 = vld [vmem:[%s0] sm:$0xf]
    %v60 = vld [vmem:[%s0 + $0x4] sm:$0xf]
    %v61 = vld [vmem:[%s0 + $0x8] sm:$0xf]
    %v62 = vld [vmem:[%s0 + $0xc] sm:$0xf]
    %v63 = vld [vmem:[%s0 + $0x10] sm:$0xf]
    %v64 = vld [vmem:[%s0 + $0x14] sm:$0xf]
    %v65 = vld [vmem:[%s0 + $0x18] sm:$0xf]
    %v66 = vld [vmem:[%s0 + $0x1c] sm:$0xf]
    %v67 = vld [vmem:[%s0 + $0x20] sm:$0xf]
    %v68 = vld [vmem:[%s0 + $0x24] sm:$0xf]
    %v69 = vld [vmem:[%s0 + $0x28] sm:$0xf]
    %v70 = vld [vmem:[%s0 + $0x2c] sm:$0xf]
    %v71 = vld [vmem:[%s0 + $0x30] sm:$0xf]
    %v72 = vld [vmem:[%s0 + $0x34] sm:$0xf]
    %v73 = vld [vmem:[%s0 + $0x38] sm:$0xf]
    %v74 = vld [vmem:[%s0 + $0x3c] sm:$0xf]
    %v75 = vld [vmem:[%s1] sm:$0xf]
    %v76 = vld [vmem:[%s1 + $0x4] sm:$0xf]
    %v77 = vld [vmem:[%s1 + $0x8] sm:$0xf]
    %v78 = vld [vmem:[%s1 + $0xc] sm:$0xf]
    %v95 = vunpack.c.l.b16 %v59
    %v96 = vunpack.c.l.b16 %v60
    %v97 = vunpack.c.l.b16 %v61
    %v98 = vunpack.c.l.b16 %v62
    %v99 = vunpack.c.l.b16 %v63
    %v100 = vunpack.c.l.b16 %v64
    %v101 = vunpack.c.l.b16 %v65
    %v102 = vunpack.c.l.b16 %v66
    %v103 = vunpack.c.l.b16 %v67
    %v104 = vunpack.c.l.b16 %v68
    %v105 = vunpack.c.l.b16 %v69
    %v106 = vunpack.c.l.b16 %v70
    %v107 = vunpack.c.l.b16 %v71
    %v108 = vunpack.c.l.b16 %v72
    %v109 = vunpack.c.l.b16 %v73
    %v110 = vunpack.c.l.b16 %v74
    %v111 = vpack.c.b16 %v96, %v95
    %v112 = vpack.c.b16 %v98, %v97
    %v113 = vpack.c.b16 %v100, %v99
    %v114 = vpack.c.b16 %v102, %v101
    %v115 = vpack.c.b16 %v104, %v103
    %v116 = vpack.c.b16 %v106, %v105
    %v117 = vpack.c.b16 %v108, %v107
    %v118 = vpack.c.b16 %v110, %v109
    %v123 = vunpack.c.l.b16 %v75
    %v124 = vunpack.c.l.b16 %v76
    %v125 = vunpack.c.l.b16 %v77
    %v126 = vunpack.c.l.b16 %v78
    %v127 = vpack.c.b16 %v124, %v123
    %v128 = vpack.c.b16 %v126, %v125
    %vm131 = vcmask 261120
    %v133 = vsel %vm131, %v111, 0
    %v136 = vsel %vm131, %v112, 0
    %v139 = vsel %vm131, %v113, 0
    %v142 = vsel %vm131, %v114, 0
    %v145 = vsel %vm131, %v115, 0
    %v148 = vsel %vm131, %v116, 0
    %v151 = vsel %vm131, %v117, 0
    %v154 = vsel %vm131, %v118, 0
    %156 = vmatprep.subr.bf16.mxu0 0
    %157 = vmatpush1.bf16.msra.mxu0 %v127
    %158 = vmatprep.subr.bf16.mxu0 0
    %159 = vmatpush1.bf16.msra.mxu0 %v128
    %160 = vmatprep.subr.bf16.mxu0 0
    %161 = vmatpush1.bf16.msra.mxu0 0
    %162 = vmatprep.subr.bf16.mxu0 0
    %163 = vmatpush1.bf16.msra.mxu0 0
    %164 = vmatprep.subr.bf16.mxu0 0
    %165 = vmatpush1.bf16.msra.mxu0 0
    %166 = vmatprep.subr.bf16.mxu0 0
    %167 = vmatpush1.bf16.msra.mxu0 0
    %168 = vmatprep.subr.bf16.mxu0 0
    %169 = vmatpush1.bf16.msra.mxu0 0
    %170 = vmatprep.subr.bf16.mxu0 0
    %171 = vmatpush1.bf16.msra.mxu0 0
    %172 = vmatprep.subr.bf16.mxu0 0
    %173 = vmatpush1.bf16.msra.mxu0 0
    %174 = vmatprep.subr.bf16.mxu0 0
    %175 = vmatpush1.bf16.msra.mxu0 0
    %176 = vmatprep.subr.bf16.mxu0 0
    %177 = vmatpush1.bf16.msra.mxu0 0
    %178 = vmatprep.subr.bf16.mxu0 0
    %179 = vmatpush1.bf16.msra.mxu0 0
    %180 = vmatprep.subr.bf16.mxu0 0
    %181 = vmatpush1.bf16.msra.mxu0 0
    %182 = vmatprep.subr.bf16.mxu0 0
    %183 = vmatpush1.bf16.msra.mxu0 0
    %184 = vmatprep.subr.bf16.mxu0 0
    %185 = vmatpush1.bf16.msra.mxu0 0
    %186 = vmatprep.subr.bf16.mxu0 0
    %187 = vmatpush1.bf16.msra.mxu0 0
    %188 = vmatprep.mubr.bf16.mxu0 0
    %189 = vmatmul.mubr.bf16.gmra.mrb[0].mxu0 %v133
    %v190 = vpop.f32.mrb[0].mxu0
    %v191 = vadd.f32 0.0, %v190
    %v192 = vpop.f32.mrb[0].mxu0
    %v193 = vpop.f32.mrb[0].mxu0
    %v194 = vadd.f32 0.0, %v193
    %v195 = vpop.f32.mrb[0].mxu0
    %196 = vmatprep.mubr.bf16.mxu0 0
    %197 = vmatmul.mubr.bf16.gmra.mrb[0].mxu0 %v136
    %v198 = vpop.f32.mrb[0].mxu0
    %v199 = vadd.f32 0.0, %v198
    %v200 = vpop.f32.mrb[0].mxu0
    %v201 = vpop.f32.mrb[0].mxu0
    %v202 = vadd.f32 0.0, %v201
    %v203 = vpop.f32.mrb[0].mxu0
    %204 = vmatprep.mubr.bf16.mxu0 0
    %205 = vmatmul.mubr.bf16.gmra.mrb[0].mxu0 %v139
    %v206 = vpop.f32.mrb[0].mxu0
    %v207 = vadd.f32 0.0, %v206
    %v208 = vpop.f32.mrb[0].mxu0
    %v209 = vpop.f32.mrb[0].mxu0
    %v210 = vadd.f32 0.0, %v209
    %v211 = vpop.f32.mrb[0].mxu0
    %212 = vmatprep.mubr.bf16.mxu0 0
    %213 = vmatmul.mubr.bf16.gmra.mrb[0].mxu0 %v142
    %v214 = vpop.f32.mrb[0].mxu0
    %v215 = vadd.f32 0.0, %v214
    %v216 = vpop.f32.mrb[0].mxu0
    %v217 = vpop.f32.mrb[0].mxu0
    %v218 = vadd.f32 0.0, %v217
    %v219 = vpop.f32.mrb[0].mxu0
    %220 = vmatprep.mubr.bf16.mxu0 0
    %221 = vmatmul.mubr.bf16.gmra.mrb[0].mxu0 %v145
    %v222 = vpop.f32.mrb[0].mxu0
    %v223 = vadd.f32 0.0, %v222
    %v224 = vpop.f32.mrb[0].mxu0
    %v225 = vpop.f32.mrb[0].mxu0
    %v226 = vadd.f32 0.0, %v225
    %v227 = vpop.f32.mrb[0].mxu0
    %228 = vmatprep.mubr.bf16.mxu0 0
    %229 = vmatmul.mubr.bf16.gmra.mrb[0].mxu0 %v148
    %v230 = vpop.f32.mrb[0].mxu0
    %v231 = vadd.f32 0.0, %v230
    %v232 = vpop.f32.mrb[0].mxu0
    %v233 = vpop.f32.mrb[0].mxu0
    %v234 = vadd.f32 0.0, %v233
    %v235 = vpop.f32.mrb[0].mxu0
    %236 = vmatprep.mubr.bf16.mxu0 0
    %237 = vmatmul.mubr.bf16.gmra.mrb[0].mxu0 %v151
    %v238 = vpop.f32.mrb[0].mxu0
    %v239 = vadd.f32 0.0, %v238
    %v240 = vpop.f32.mrb[0].mxu0
    %v241 = vpop.f32.mrb[0].mxu0
    %v242 = vadd.f32 0.0, %v241
    %v243 = vpop.f32.mrb[0].mxu0
    %244 = vmatprep.mubr.bf16.mxu0 0
    %245 = vmatmul.mubr.bf16.gmra.mrb[0].mxu0 %v154
    %v246 = vpop.f32.mrb[0].mxu0
    %v247 = vadd.f32 0.0, %v246
    %v248 = vpop.f32.mrb[0].mxu0
    %v249 = vpop.f32.mrb[0].mxu0
    %v250 = vadd.f32 0.0, %v249
    %v251 = vpop.f32.mrb[0].mxu0
    %252 = vdwg.mxu0
    %v253 = vadd.f32 %v43, %v191
    %v254 = vadd.f32 %v44, %v194
    %v255 = vadd.f32 %v45, %v199
    %v256 = vadd.f32 %v46, %v202
    %v257 = vadd.f32 %v47, %v207
    %v258 = vadd.f32 %v48, %v210
    %v259 = vadd.f32 %v49, %v215
    %v260 = vadd.f32 %v50, %v218
    %v261 = vadd.f32 %v51, %v223
    %v262 = vadd.f32 %v52, %v226
    %v263 = vadd.f32 %v53, %v231
    %v264 = vadd.f32 %v54, %v234
    %v265 = vadd.f32 %v55, %v239
    %v266 = vadd.f32 %v56, %v242
    %v267 = vadd.f32 %v57, %v247
    %v268 = vadd.f32 %v58, %v250
    %269 = vst [vmem:[#allocation2] sm:$0xff] %v253
    %270 = vst [vmem:[#allocation2 + $0x8] sm:$0xff] %v254
    %271 = vst [vmem:[#allocation2 + $0x10] sm:$0xff] %v255
    %272 = vst [vmem:[#allocation2 + $0x18] sm:$0xff] %v256
    %273 = vst [vmem:[#allocation2 + $0x20] sm:$0xff] %v257
    %274 = vst [vmem:[#allocation2 + $0x28] sm:$0xff] %v258
    %275 = vst [vmem:[#allocation2 + $0x30] sm:$0xff] %v259
    %276 = vst [vmem:[#allocation2 + $0x38] sm:$0xff] %v260
    %277 = vst [vmem:[#allocation2 + $0x40] sm:$0xff] %v261
    %278 = vst [vmem:[#allocation2 + $0x48] sm:$0xff] %v262
    %279 = vst [vmem:[#allocation2 + $0x50] sm:$0xff] %v263
    %280 = vst [vmem:[#allocation2 + $0x58] sm:$0xff] %v264
    %281 = vst [vmem:[#allocation2 + $0x60] sm:$0xff] %v265
    %282 = vst [vmem:[#allocation2 + $0x68] sm:$0xff] %v266
    %283 = vst [vmem:[#allocation2 + $0x70] sm:$0xff] %v267
    %284 = vst [vmem:[#allocation2 + $0x78] sm:$0xff] %v268
    // Predicated region
    $region18: #{tpu_custom_call.1} parent=1 // pred_check
      %p285 = pneg %p16
    $region19: #{tpu_custom_call.1} parent=1 // pred_check_branch
      %287 = sbr.rel (%p285) target = $region21
    $region20: #{tpu_custom_call.1} parent=1 // pred_region
      %v288 = vld [vmem:[#allocation2] sm:$0xff]
      %v289 = vld [vmem:[#allocation2 + $0x8] sm:$0xff]
      %v290 = vld [vmem:[#allocation2 + $0x10] sm:$0xff]
      %v291 = vld [vmem:[#allocation2 + $0x18] sm:$0xff]
      %v292 = vld [vmem:[#allocation2 + $0x20] sm:$0xff]
      %v293 = vld [vmem:[#allocation2 + $0x28] sm:$0xff]
      %v294 = vld [vmem:[#allocation2 + $0x30] sm:$0xff]
      %v295 = vld [vmem:[#allocation2 + $0x38] sm:$0xff]
      %v296 = vld [vmem:[#allocation2 + $0x40] sm:$0xff]
      %v297 = vld [vmem:[#allocation2 + $0x48] sm:$0xff]
      %v298 = vld [vmem:[#allocation2 + $0x50] sm:$0xff]
      %v299 = vld [vmem:[#allocation2 + $0x58] sm:$0xff]
      %v300 = vld [vmem:[#allocation2 + $0x60] sm:$0xff]
      %v301 = vld [vmem:[#allocation2 + $0x68] sm:$0xff]
      %v302 = vld [vmem:[#allocation2 + $0x70] sm:$0xff]
      %v303 = vld [vmem:[#allocation2 + $0x78] sm:$0xff]
      %v304 = vmax.f32 %v288, 0.0
      %v305 = vmax.f32 %v289, 0.0
      %v306 = vmax.f32 %v290, 0.0
      %v307 = vmax.f32 %v291, 0.0
      %v308 = vmax.f32 %v292, 0.0
      %v309 = vmax.f32 %v293, 0.0
      %v310 = vmax.f32 %v294, 0.0
      %v311 = vmax.f32 %v295, 0.0
      %v312 = vmax.f32 %v296, 0.0
      %v313 = vmax.f32 %v297, 0.0
      %v314 = vmax.f32 %v298, 0.0
      %v315 = vmax.f32 %v299, 0.0
      %v316 = vmax.f32 %v300, 0.0
      %v317 = vmax.f32 %v301, 0.0
      %v318 = vmax.f32 %v302, 0.0
      %v319 = vmax.f32 %v303, 0.0
      %v320 = vpack.c.bf16 %v305, %v304
      %v321 = vpack.c.bf16 %v307, %v306
      %v322 = vpack.c.bf16 %v309, %v308
      %v323 = vpack.c.bf16 %v311, %v310
      %v324 = vpack.c.bf16 %v313, %v312
      %v325 = vpack.c.bf16 %v315, %v314
      %v326 = vpack.c.bf16 %v317, %v316
      %v327 = vpack.c.bf16 %v319, %v318
      %v336 = vunpack.c.l.b16 %v320
      %v337 = vunpack.c.h.b16 %v320
      %v338 = vunpack.c.l.b16 %v321
      %v339 = vunpack.c.h.b16 %v321
      %v340 = vunpack.c.l.b16 %v322
      %v341 = vunpack.c.h.b16 %v322
      %v342 = vunpack.c.l.b16 %v323
      %v343 = vunpack.c.h.b16 %v323
      %v344 = vunpack.c.l.b16 %v324
      %v345 = vunpack.c.h.b16 %v324
      %v346 = vunpack.c.l.b16 %v325
      %v347 = vunpack.c.h.b16 %v325
      %v348 = vunpack.c.l.b16 %v326
      %v349 = vunpack.c.h.b16 %v326
      %v350 = vunpack.c.l.b16 %v327
      %v351 = vunpack.c.h.b16 %v327
      %v352 = vpack.c.b16 %v336, %v336
      %v353 = vpack.c.b16 %v337, %v337
      %v354 = vpack.c.b16 %v338, %v338
      %v355 = vpack.c.b16 %v339, %v339
      %v356 = vpack.c.b16 %v340, %v340
      %v357 = vpack.c.b16 %v341, %v341
      %v358 = vpack.c.b16 %v342, %v342
      %v359 = vpack.c.b16 %v343, %v343
      %v360 = vpack.c.b16 %v344, %v344
      %v361 = vpack.c.b16 %v345, %v345
      %v362 = vpack.c.b16 %v346, %v346
      %v363 = vpack.c.b16 %v347, %v347
      %v364 = vpack.c.b16 %v348, %v348
      %v365 = vpack.c.b16 %v349, %v349
      %v366 = vpack.c.b16 %v350, %v350
      %v367 = vpack.c.b16 %v351, %v351
      %384 = vst [vmem:[#allocation3] sm:$0xf] %v352
      %385 = vst [vmem:[#allocation3 + $0x4] sm:$0xf] %v353
      %386 = vst [vmem:[#allocation3 + $0x8] sm:$0xf] %v354
      %387 = vst [vmem:[#allocation3 + $0xc] sm:$0xf] %v355
      %388 = vst [vmem:[#allocation3 + $0x10] sm:$0xf] %v356
      %389 = vst [vmem:[#allocation3 + $0x14] sm:$0xf] %v357
      %390 = vst [vmem:[#allocation3 + $0x18] sm:$0xf] %v358
      %391 = vst [vmem:[#allocation3 + $0x1c] sm:$0xf] %v359
      %392 = vst [vmem:[#allocation3 + $0x20] sm:$0xf] %v360
      %393 = vst [vmem:[#allocation3 + $0x24] sm:$0xf] %v361
      %394 = vst [vmem:[#allocation3 + $0x28] sm:$0xf] %v362
      %395 = vst [vmem:[#allocation3 + $0x2c] sm:$0xf] %v363
      %396 = vst [vmem:[#allocation3 + $0x30] sm:$0xf] %v364
      %397 = vst [vmem:[#allocation3 + $0x34] sm:$0xf] %v365
      %398 = vst [vmem:[#allocation3 + $0x38] sm:$0xf] %v366
      %399 = vst [vmem:[#allocation3 + $0x3c] sm:$0xf] %v367
    $region21: #{tpu_custom_call.1} parent=1 // pred_fallthru
      _
    // Predicated region
    $region22: #{tpu_custom_call.1} parent=1 // pred_check
      _
    $region23: #{tpu_custom_call.1} parent=1 // pred_check_branch
      %401 = sbr.rel (0) target = $region25
    $region24: #{tpu_custom_call.1} parent=1 // pred_region
      %s403 = ssub.s32 1024, 1024
      %404 = vsyncadd [#allocation4], %s403
      %s405 = sshll.u32 [#allocation3], 4
      %s406 = int_to_ptr.vmem [resolvable:$true] %s405
      %411 = dma.vmem_to_hbm [thread:$0]  %s406, 1024, %s3, [#allocation4], 64, 64, 4
    $region25: #{tpu_custom_call.1} parent=1 // pred_fallthru
      _
    // Predicated region
    $region26: #{tpu_custom_call.1} parent=1 // pred_check
      _
    $region27: #{tpu_custom_call.1} parent=1 // pred_check_branch
      %413 = sbr.rel (0) target = $region29
    $region28: #{tpu_custom_call.1} parent=1 // pred_region
      %414 = dma.done [#allocation4], 1024
    $region29: #{tpu_custom_call.1} parent=1 // pred_fallthru
      _
    %415 = vsyncpa [#allocation4], 1

</llo_original>
